<compile_context>
chip_gen: v6e
topology: v6e:2x2x1
jax: 0.10.0
libtpu: 0.0.40
codegen_flags: <defaults>
</compile_context>

<pallas_src>
import jax
import jax.numpy as jnp
from jax.experimental import pallas as pl
from jax.experimental.pallas import tpu as pltpu


def _round_up(n, m):
    return ((n + m - 1) // m) * m


def _cdiv(a, b):
    return (a + b - 1) // b


def _choose_tb(B, D, *, stream_budget_bytes=8 << 20, tb_cap=32768):
    """Batch tile: biggest lane-aligned tile whose double-buffered f32 x stream
    stays under `stream_budget_bytes`, with >=2 grid steps when B allows it."""
    tb = (stream_budget_bytes // (2 * 4 * max(D, 1))) // 128 * 128
    tb = max(128, min(tb, tb_cap))
    tb = min(tb, _round_up(B, 128))
    # Guarantee >= 2 grid steps so ("parallel",) can shard across v7x's two
    # TensorCores; harmless no-op on single-TC v5e/v6e.
    if B > 128 and _cdiv(B, tb) < 2:
        tb = max(128, _round_up(_cdiv(B, 2), 128))
    return tb


def _mlp_kernel(x_ref,
                w1t_ref, b1_ref,
                w2_ref, b2_ref,
                w3_ref, b3_ref,
                w4_ref, b4_ref,
                w5_ref, b5_ref,
                o_ref):
    # x tile: [TB, D].  Weights arrive already in bf16 (cast once in wrapper);
    # the x cast below is a no-op if x is streamed as bf16 end-to-end.
    xb = x_ref[...].astype(jnp.bfloat16)

    # ---- Layer 1 (MXU-natural, no x-tile transpose) -------------------------
    # [TB, D] @ [D, 16] -> [TB, 16], f32 accumulation.
    p = jnp.dot(xb, w1t_ref[...], preferred_element_type=jnp.float32)
    p = jnp.maximum(p + b1_ref[...], 0.0)          # b1 is [1, 16]
    # Transpose only the narrow [TB, 16] intermediate so the batch occupies the
    # 128-wide lane axis for the remaining layers and the final store.
    h = p.T                                        # [16, TB] f32

    # ---- Layers 2-4: [out, in] @ [in, TB] -> [out, TB], bf16 ops / f32 acc --
    h = jnp.dot(w2_ref[...], h.astype(jnp.bfloat16),
                preferred_element_type=jnp.float32)
    h = jnp.maximum(h + b2_ref[...], 0.0)

    h = jnp.dot(w3_ref[...], h.astype(jnp.bfloat16),
                preferred_element_type=jnp.float32)
    h = jnp.maximum(h + b3_ref[...], 0.0)

    h = jnp.dot(w4_ref[...], h.astype(jnp.bfloat16),
                preferred_element_type=jnp.float32)
    h = jnp.maximum(h + b4_ref[...], 0.0)

    # ---- Layer 5 (no ReLU): [1, 8] @ [8, TB] -> [1, TB], lane-dense store ---
    h = jnp.dot(w5_ref[...], h.astype(jnp.bfloat16),
                preferred_element_type=jnp.float32)
    o_ref[...] = (h + b5_ref[...]).astype(o_ref.dtype)


def my_model_forward(x, params, *, tb=None):
    """x: [B, D] float32 or bfloat16.  params: list of (W [out, in], b [out, 1]).

    Returns [B] float32 (matches PyTorch forward: layers(x).squeeze(1))."""
    B, D = x.shape

    if tb is None:
        tb = _choose_tb(B, D)
    else:
        tb = max(128, _round_up(tb, 128))

    (w1, b1), (w2, b2), (w3, b3), (w4, b4), (w5, b5) = params
    # One-time tiny wrapper-side prep: W1 pre-transposed to [D, 16]; all weights
    # cast to bf16 (VMEM-resident across the whole grid); biases stay f32.
    flat = [
        w1.T.astype(jnp.bfloat16), b1.reshape(1, -1).astype(jnp.float32),
        w2.astype(jnp.bfloat16),   b2.astype(jnp.float32),
        w3.astype(jnp.bfloat16),   b3.astype(jnp.float32),
        w4.astype(jnp.bfloat16),   b4.astype(jnp.float32),
        w5.astype(jnp.bfloat16),   b5.astype(jnp.float32),
    ]

    grid = (_cdiv(B, tb),)   # ragged last block; no wrapper padding pass

    def resident(p):  # whole array, constant block index -> stays in VMEM
        return pl.BlockSpec(p.shape, lambda i: (0, 0))

    in_specs = [pl.BlockSpec((tb, D), lambda i: (i, 0))] + \
               [resident(p) for p in flat]

    out = pl.pallas_call(
        _mlp_kernel,
        out_shape=jax.ShapeDtypeStruct((1, B), jnp.float32),
        grid=grid,
        in_specs=in_specs,
        out_specs=pl.BlockSpec((1, tb), lambda i: (0, i)),
        compiler_params=pltpu.CompilerParams(
            dimension_semantics=("parallel",),     # shard batch tiles across TCs
            vmem_limit_bytes=32 * 1024 * 1024,     # fits v5e/v6e/v7x comfortably
        ),
    )(x, *flat)

    # out is [1, B] with batch on the lane axis; row 0 is the squeeze(1) result.
    return out[0]


def init_params(input_dim, key):
    """Deterministic init with nn.Linear-style shapes: W [out, in], b [out, 1]."""
    dims = [(input_dim, 16), (16, 16), (16, 16), (16, 8), (8, 1)]
    params = []
    for (din, dout) in dims:
        key, kw, kb = jax.random.split(key, 3)
        bound = 1.0 / (din ** 0.5)
        W = jax.random.uniform(kw, (dout, din), jnp.float32, -bound, bound)
        b = jax.random.uniform(kb, (dout, 1), jnp.float32, -bound, bound)
        params.append((W, b))
    return params


def reference_forward(x, params):
    h = x.astype(jnp.float32)
    for i, (W, b) in enumerate(params):
        h = h @ W.T + b[:, 0]
        if i < len(params) - 1:
            h = jnp.maximum(h, 0.0)
    return h[:, 0]


if __name__ == "__main__":
    key = jax.random.PRNGKey(0)
    k_x, k_x2, k_p = jax.random.split(key, 3)

    D = 32
    params = init_params(D, k_p)

    # Small case (B=8 -> one ragged 128-row block, single grid step).
    x_small = jax.random.normal(k_x, (8, D), dtype=jnp.float32)
    y_small = jax.block_until_ready(my_model_forward(x_small, params))
    assert y_small.shape == (8,)
    y_small_ref = reference_forward(x_small, params)
    assert jnp.allclose(y_small, y_small_ref, atol=5e-2, rtol=5e-2), (y_small, y_small_ref)

    # Ragged multi-step case: B=300 -> tb=256, 2 grid steps, last block ragged.
    x_big = jax.random.normal(k_x2, (300, D), dtype=jnp.float32)
    y_big = jax.block_until_ready(my_model_forward(x_big, params))
    assert y_big.shape == (300,)
    y_big_ref = reference_forward(x_big, params)
    assert jnp.allclose(y_big, y_big_ref, atol=5e-2, rtol=5e-2), (y_big, y_big_ref)

    # Explicit small tile (tb=128 -> 3 steps incl. ragged tail) exercising the
    # pipelined grid; also run the bf16-input streaming path once.
    y_big2 = jax.block_until_ready(my_model_forward(x_big, params, tb=128))
    assert jnp.allclose(y_big2, y_big_ref, atol=5e-2, rtol=5e-2)

    y_bf16 = jax.block_until_ready(
        my_model_forward(x_big.astype(jnp.bfloat16), params))
    assert jnp.allclose(y_bf16, y_big_ref, atol=8e-2, rtol=8e-2)

    print("KERNEL_OK")
</pallas_src>

<mosaic_0001>
module attributes {stable_mosaic.version = 11 : i64} {
  func.func @_mlp_kernel(%arg0: i32, %arg1: memref<128x32xf32, #tpu.memory_space<vmem>>, %arg2: memref<32x16xbf16, #tpu.memory_space<vmem>>, %arg3: memref<1x16xf32, #tpu.memory_space<vmem>>, %arg4: memref<16x16xbf16, #tpu.memory_space<vmem>>, %arg5: memref<16x1xf32, #tpu.memory_space<vmem>>, %arg6: memref<16x16xbf16, #tpu.memory_space<vmem>>, %arg7: memref<16x1xf32, #tpu.memory_space<vmem>>, %arg8: memref<8x16xbf16, #tpu.memory_space<vmem>>, %arg9: memref<8x1xf32, #tpu.memory_space<vmem>>, %arg10: memref<1x8xbf16, #tpu.memory_space<vmem>>, %arg11: memref<1x1xf32, #tpu.memory_space<vmem>>, %arg12: memref<1x128xf32, #tpu.memory_space<vmem>>) attributes {dimension_semantics = [#tpu.dimension_semantics<parallel>], iteration_bounds = array<i64: 1>, scalar_prefetch = 0 : i64, scratch_operands = 0 : i64, tpu.core_type = #tpu.core_type<tc>, window_params = [{transform_indices = @transform_0, window_bounds = array<i64: 128, 32>}, {pipeline_mode = #tpu.pipeline_mode<synchronous>, transform_indices = @transform_1, window_bounds = array<i64: 32, 16>}, {pipeline_mode = #tpu.pipeline_mode<synchronous>, transform_indices = @transform_2, window_bounds = array<i64: 1, 16>}, {pipeline_mode = #tpu.pipeline_mode<synchronous>, transform_indices = @transform_3, window_bounds = array<i64: 16, 16>}, {pipeline_mode = #tpu.pipeline_mode<synchronous>, transform_indices = @transform_4, window_bounds = array<i64: 16, 1>}, {pipeline_mode = #tpu.pipeline_mode<synchronous>, transform_indices = @transform_5, window_bounds = array<i64: 16, 16>}, {pipeline_mode = #tpu.pipeline_mode<synchronous>, transform_indices = @transform_6, window_bounds = array<i64: 16, 1>}, {pipeline_mode = #tpu.pipeline_mode<synchronous>, transform_indices = @transform_7, window_bounds = array<i64: 8, 16>}, {pipeline_mode = #tpu.pipeline_mode<synchronous>, transform_indices = @transform_8, window_bounds = array<i64: 8, 1>}, {pipeline_mode = #tpu.pipeline_mode<synchronous>, transform_indices = @transform_9, window_bounds = array<i64: 1, 8>}, {pipeline_mode = #tpu.pipeline_mode<synchronous>, transform_indices = @transform_10, window_bounds = array<i64: 1, 1>}, {transform_indices = @transform_11, window_bounds = array<i64: 1, 128>}]} {
    %c0 = arith.constant 0 : index
    %c0_0 = arith.constant 0 : index
    %0 = vector.load %arg1[%c0, %c0_0] : memref<128x32xf32, #tpu.memory_space<vmem>>, vector<128x32xf32>
    %1 = arith.truncf %0 : vector<128x32xf32> to vector<128x32xbf16>
    %c0_1 = arith.constant 0 : index
    %c0_2 = arith.constant 0 : index
    %2 = vector.load %arg2[%c0_1, %c0_2] : memref<32x16xbf16, #tpu.memory_space<vmem>>, vector<32x16xbf16>
    %cst = arith.constant dense<0.000000e+00> : vector<128x16xf32>
    %3 = tpu.matmul %1, %2, %cst {dimension_numbers = #tpu.dot_dimension_numbers<[1], [0], [0], [1], [0, 0, 1, 1], [], []>} : vector<128x32xbf16>, vector<32x16xbf16>, vector<128x16xf32> -> vector<128x16xf32>
    %c0_3 = arith.constant 0 : index
    %c0_4 = arith.constant 0 : index
    %4 = vector.load %arg3[%c0_3, %c0_4] : memref<1x16xf32, #tpu.memory_space<vmem>>, vector<1x16xf32>
    %5 = vector.broadcast %4 : vector<1x16xf32> to vector<128x16xf32>
    %6 = arith.addf %3, %5 : vector<128x16xf32>
    %cst_5 = arith.constant 0.000000e+00 : f32
    %7 = vector.broadcast %cst_5 : f32 to vector<128x16xf32>
    %8 = arith.maximumf %6, %7 : vector<128x16xf32>
    %9 = tpu.transpose %8, [1, 0] : vector<128x16xf32> -> vector<16x128xf32>
    %c0_6 = arith.constant 0 : index
    %c0_7 = arith.constant 0 : index
    %10 = vector.load %arg4[%c0_6, %c0_7] : memref<16x16xbf16, #tpu.memory_space<vmem>>, vector<16x16xbf16>
    %11 = arith.truncf %9 : vector<16x128xf32> to vector<16x128xbf16>
    %cst_8 = arith.constant dense<0.000000e+00> : vector<16x128xf32>
    %12 = tpu.matmul %10, %11, %cst_8 {dimension_numbers = #tpu.dot_dimension_numbers<[1], [0], [0], [1], [0, 0, 1, 1], [], []>} : vector<16x16xbf16>, vector<16x128xbf16>, vector<16x128xf32> -> vector<16x128xf32>
    %c0_9 = arith.constant 0 : index
    %c0_10 = arith.constant 0 : index
    %13 = vector.load %arg5[%c0_9, %c0_10] : memref<16x1xf32, #tpu.memory_space<vmem>>, vector<16x1xf32>
    %14 = vector.broadcast %13 : vector<16x1xf32> to vector<16x128xf32>
    %15 = arith.addf %12, %14 : vector<16x128xf32>
    %cst_11 = arith.constant 0.000000e+00 : f32
    %16 = vector.broadcast %cst_11 : f32 to vector<16x128xf32>
    %17 = arith.maximumf %15, %16 : vector<16x128xf32>
    %c0_12 = arith.constant 0 : index
    %c0_13 = arith.constant 0 : index
    %18 = vector.load %arg6[%c0_12, %c0_13] : memref<16x16xbf16, #tpu.memory_space<vmem>>, vector<16x16xbf16>
    %19 = arith.truncf %17 : vector<16x128xf32> to vector<16x128xbf16>
    %cst_14 = arith.constant dense<0.000000e+00> : vector<16x128xf32>
    %20 = tpu.matmul %18, %19, %cst_14 {dimension_numbers = #tpu.dot_dimension_numbers<[1], [0], [0], [1], [0, 0, 1, 1], [], []>} : vector<16x16xbf16>, vector<16x128xbf16>, vector<16x128xf32> -> vector<16x128xf32>
    %c0_15 = arith.constant 0 : index
    %c0_16 = arith.constant 0 : index
    %21 = vector.load %arg7[%c0_15, %c0_16] : memref<16x1xf32, #tpu.memory_space<vmem>>, vector<16x1xf32>
    %22 = vector.broadcast %21 : vector<16x1xf32> to vector<16x128xf32>
    %23 = arith.addf %20, %22 : vector<16x128xf32>
    %cst_17 = arith.constant 0.000000e+00 : f32
    %24 = vector.broadcast %cst_17 : f32 to vector<16x128xf32>
    %25 = arith.maximumf %23, %24 : vector<16x128xf32>
    %c0_18 = arith.constant 0 : index
    %c0_19 = arith.constant 0 : index
    %26 = vector.load %arg8[%c0_18, %c0_19] : memref<8x16xbf16, #tpu.memory_space<vmem>>, vector<8x16xbf16>
    %27 = arith.truncf %25 : vector<16x128xf32> to vector<16x128xbf16>
    %cst_20 = arith.constant dense<0.000000e+00> : vector<8x128xf32>
    %28 = tpu.matmul %26, %27, %cst_20 {dimension_numbers = #tpu.dot_dimension_numbers<[1], [0], [0], [1], [0, 0, 1, 1], [], []>} : vector<8x16xbf16>, vector<16x128xbf16>, vector<8x128xf32> -> vector<8x128xf32>
    %c0_21 = arith.constant 0 : index
    %c0_22 = arith.constant 0 : index
    %29 = vector.load %arg9[%c0_21, %c0_22] : memref<8x1xf32, #tpu.memory_space<vmem>>, vector<8x1xf32>
    %30 = vector.broadcast %29 : vector<8x1xf32> to vector<8x128xf32>
    %31 = arith.addf %28, %30 : vector<8x128xf32>
    %cst_23 = arith.constant 0.000000e+00 : f32
    %32 = vector.broadcast %cst_23 : f32 to vector<8x128xf32>
    %33 = arith.maximumf %31, %32 : vector<8x128xf32>
    %c0_24 = arith.constant 0 : index
    %c0_25 = arith.constant 0 : index
    %34 = vector.load %arg10[%c0_24, %c0_25] : memref<1x8xbf16, #tpu.memory_space<vmem>>, vector<1x8xbf16>
    %35 = arith.truncf %33 : vector<8x128xf32> to vector<8x128xbf16>
    %cst_26 = arith.constant dense<0.000000e+00> : vector<1x128xf32>
    %36 = tpu.matmul %34, %35, %cst_26 {dimension_numbers = #tpu.dot_dimension_numbers<[1], [0], [0], [1], [0, 0, 1, 1], [], []>} : vector<1x8xbf16>, vector<8x128xbf16>, vector<1x128xf32> -> vector<1x128xf32>
    %c0_27 = arith.constant 0 : index
    %c0_28 = arith.constant 0 : index
    %37 = vector.load %arg11[%c0_27, %c0_28] : memref<1x1xf32, #tpu.memory_space<vmem>>, vector<1x1xf32>
    %38 = vector.broadcast %37 : vector<1x1xf32> to vector<1x128xf32>
    %39 = arith.addf %36, %38 : vector<1x128xf32>
    %c0_29 = arith.constant 0 : index
    %c0_30 = arith.constant 0 : index
    %40 = vector.load %arg12[%c0_29, %c0_30] : memref<1x128xf32, #tpu.memory_space<vmem>>, vector<1x128xf32>
    tpu.vector_store %arg12[%c0_29, %c0_30], %39 {strides = array<i32>} : memref<1x128xf32, #tpu.memory_space<vmem>>, vector<1x128xf32>,
    return
  }
  func.func @transform_0(%arg0: i32) -> (i32, i32) {
    %c0_i32 = arith.constant 0 : i32
    %c0_i32_0 = arith.constant 0 : i32
    return %arg0, %c0_i32 : i32, i32
  }
  func.func @transform_1(%arg0: i32) -> (i32, i32) {
    %c0_i32 = arith.constant 0 : i32
    %c0_i32_0 = arith.constant 0 : i32
    %c0_i32_1 = arith.constant 0 : i32
    return %c0_i32, %c0_i32_0 : i32, i32
  }
  func.func @transform_2(%arg0: i32) -> (i32, i32) {
    %c0_i32 = arith.constant 0 : i32
    %c0_i32_0 = arith.constant 0 : i32
    %c0_i32_1 = arith.constant 0 : i32
    return %c0_i32, %c0_i32_0 : i32, i32
  }
  func.func @transform_3(%arg0: i32) -> (i32, i32) {
    %c0_i32 = arith.constant 0 : i32
    %c0_i32_0 = arith.constant 0 : i32
    %c0_i32_1 = arith.constant 0 : i32
    return %c0_i32, %c0_i32_0 : i32, i32
  }
  func.func @transform_4(%arg0: i32) -> (i32, i32) {
    %c0_i32 = arith.constant 0 : i32
    %c0_i32_0 = arith.constant 0 : i32
    %c0_i32_1 = arith.constant 0 : i32
    return %c0_i32, %c0_i32_0 : i32, i32
  }
  func.func @transform_5(%arg0: i32) -> (i32, i32) {
    %c0_i32 = arith.constant 0 : i32
    %c0_i32_0 = arith.constant 0 : i32
    %c0_i32_1 = arith.constant 0 : i32
    return %c0_i32, %c0_i32_0 : i32, i32
  }
  func.func @transform_6(%arg0: i32) -> (i32, i32) {
    %c0_i32 = arith.constant 0 : i32
    %c0_i32_0 = arith.constant 0 : i32
    %c0_i32_1 = arith.constant 0 : i32
    return %c0_i32, %c0_i32_0 : i32, i32
  }
  func.func @transform_7(%arg0: i32) -> (i32, i32) {
    %c0_i32 = arith.constant 0 : i32
    %c0_i32_0 = arith.constant 0 : i32
    %c0_i32_1 = arith.constant 0 : i32
    return %c0_i32, %c0_i32_0 : i32, i32
  }
  func.func @transform_8(%arg0: i32) -> (i32, i32) {
    %c0_i32 = arith.constant 0 : i32
    %c0_i32_0 = arith.constant 0 : i32
    %c0_i32_1 = arith.constant 0 : i32
    return %c0_i32, %c0_i32_0 : i32, i32
  }
  func.func @transform_9(%arg0: i32) -> (i32, i32) {
    %c0_i32 = arith.constant 0 : i32
    %c0_i32_0 = arith.constant 0 : i32
    %c0_i32_1 = arith.constant 0 : i32
    return %c0_i32, %c0_i32_0 : i32, i32
  }
  func.func @transform_10(%arg0: i32) -> (i32, i32) {
    %c0_i32 = arith.constant 0 : i32
    %c0_i32_0 = arith.constant 0 : i32
    %c0_i32_1 = arith.constant 0 : i32
    return %c0_i32, %c0_i32_0 : i32, i32
  }
  func.func @transform_11(%arg0: i32) -> (i32, i32) {
    %c0_i32 = arith.constant 0 : i32
    %c0_i32_0 = arith.constant 0 : i32
    return %c0_i32, %arg0 : i32, i32
  }
}

</mosaic_0001>

<llo_original>
// kernel: tpu_custom_call.1
$region0: #{tpu_custom_call.1}
  #allocation0 [shape = 'u32[]', space=smem, size = 0x4, offset = 0x4, fixed_abs, tag = 'smem constant byte address 0x4 - core index']
  #allocation1 [shape = 'u32[144,128]{1,0:T(1,128)}', space=vmem, size = 0x12000, scoped, tag = 'internal scratch']
  #allocation2 [shape = 'f32[1,1]{1,0:T(1,128)S(1)}', space=vmem, size = 0x200, scoped, tag = 'scoped memory for tpu_custom_call.1']
  %s0 = inlined_call_operand.vmem [shape: f32[8,32], index: 0, kind: input, shape index: {}]
  %s1 = inlined_call_operand.vmem [shape: bf16[32,16], index: 1, kind: input, shape index: {}]
  %s2 = inlined_call_operand.vmem [shape: f32[1,16], index: 2, kind: input, shape index: {}]
  %s3 = inlined_call_operand.vmem [shape: bf16[16,16], index: 3, kind: input, shape index: {}]
  %s4 = inlined_call_operand.vmem [shape: f32[16,1], index: 4, kind: input, shape index: {}]
  %s5 = inlined_call_operand.vmem [shape: bf16[16,16], index: 5, kind: input, shape index: {}]
  %s6 = inlined_call_operand.vmem [shape: f32[16,1], index: 6, kind: input, shape index: {}]
  %s7 = inlined_call_operand.vmem [shape: bf16[8,16], index: 7, kind: input, shape index: {}]
  %s8 = inlined_call_operand.vmem [shape: f32[8,1], index: 8, kind: input, shape index: {}]
  %s9 = inlined_call_operand.vmem [shape: bf16[1,8], index: 9, kind: input, shape index: {}]
  %s10 = inlined_call_operand.<no memory space> [shape: f32[1,1], index: 10, kind: input, shape index: {}]
  %s11 = inlined_call_operand.hbm [shape: f32[1,8], index: 11, kind: output, shape index: {}]
  %s12 = sld [smem:[#allocation0]]
  $region54: #{tpu_custom_call.1} parent=0
    _
  %s14 = ssub.s32 1, %s12
  %s15 = scalar_select 0, %s14, %s12
  %v16 = vstv %s10
  %17 = vst [vmem:[#allocation2] sm:$0x1] %v16
  $region1: #{tpu_custom_call.1} parent=0
    #allocation3 [shape = 'u8[512]{0}', space=vmem, size = 0x400, scoped, tag = 'output window, operand 0, single buffered']
    #allocation4 [shape = 's32[1]{0}', space=sflag, size = 0x4, scoped, tag = 'scoped memory for tpu_custom_call.1']
    %18 = vsyncpa [#allocation4], 0
    // Predicated region
    $region2: #{tpu_custom_call.1} parent=1 // pred_check
      _
    $region3: #{tpu_custom_call.1} parent=1 // pred_check_branch
      %20 = sbr.rel (0) target = $region5
    $region4: #{tpu_custom_call.1} parent=1 // pred_region
      _
    $region5: #{tpu_custom_call.1} parent=1 // pred_fallthru
      _
    // Predicated region
    $region6: #{tpu_custom_call.1} parent=1 // pred_check
      _
    $region7: #{tpu_custom_call.1} parent=1 // pred_check_branch
      %22 = sbr.rel (0) target = $region9
    $region8: #{tpu_custom_call.1} parent=1 // pred_region
      _
    $region9: #{tpu_custom_call.1} parent=1 // pred_fallthru
      _
    // Predicated region
    $region10: #{tpu_custom_call.1} parent=1 // pred_check
      _
    $region11: #{tpu_custom_call.1} parent=1 // pred_check_branch
      %24 = sbr.rel (0) target = $region13
    $region12: #{tpu_custom_call.1} parent=1 // pred_region
      _
    $region13: #{tpu_custom_call.1} parent=1 // pred_fallthru
      _
    // Predicated region
    $region14: #{tpu_custom_call.1} parent=1 // pred_check
      _
    $region15: #{tpu_custom_call.1} parent=1 // pred_check_branch
      %26 = sbr.rel (0) target = $region17
    $region16: #{tpu_custom_call.1} parent=1 // pred_region
      _
    $region17: #{tpu_custom_call.1} parent=1 // pred_fallthru
      _
    // Predicated region
    $region18: #{tpu_custom_call.1} parent=1 // pred_check
      _
    $region19: #{tpu_custom_call.1} parent=1 // pred_check_branch
      %28 = sbr.rel (0) target = $region21
    $region20: #{tpu_custom_call.1} parent=1 // pred_region
      _
    $region21: #{tpu_custom_call.1} parent=1 // pred_fallthru
      _
    // Predicated region
    $region22: #{tpu_custom_call.1} parent=1 // pred_check
      _
    $region23: #{tpu_custom_call.1} parent=1 // pred_check_branch
      %30 = sbr.rel (0) target = $region25
    $region24: #{tpu_custom_call.1} parent=1 // pred_region
      _
    $region25: #{tpu_custom_call.1} parent=1 // pred_fallthru
      _
    // Predicated region
    $region26: #{tpu_custom_call.1} parent=1 // pred_check
      _
    $region27: #{tpu_custom_call.1} parent=1 // pred_check_branch
      %32 = sbr.rel (0) target = $region29
    $region28: #{tpu_custom_call.1} parent=1 // pred_region
      _
    $region29: #{tpu_custom_call.1} parent=1 // pred_fallthru
      _
    // Predicated region
    $region30: #{tpu_custom_call.1} parent=1 // pred_check
      _
    $region31: #{tpu_custom_call.1} parent=1 // pred_check_branch
      %34 = sbr.rel (0) target = $region33
    $region32: #{tpu_custom_call.1} parent=1 // pred_region
      _
    $region33: #{tpu_custom_call.1} parent=1 // pred_fallthru
      _
    // Predicated region
    $region34: #{tpu_custom_call.1} parent=1 // pred_check
      _
    $region35: #{tpu_custom_call.1} parent=1 // pred_check_branch
      %36 = sbr.rel (0) target = $region37
    $region36: #{tpu_custom_call.1} parent=1 // pred_region
      _
    $region37: #{tpu_custom_call.1} parent=1 // pred_fallthru
      _
    // Predicated region
    $region38: #{tpu_custom_call.1} parent=1 // pred_check
      _
    $region39: #{tpu_custom_call.1} parent=1 // pred_check_branch
      %38 = sbr.rel (0) target = $region41
    $region40: #{tpu_custom_call.1} parent=1 // pred_region
      _
    $region41: #{tpu_custom_call.1} parent=1 // pred_fallthru
      _
    // Predicated region
    $region42: #{tpu_custom_call.1} parent=1 // pred_check
      _
    $region43: #{tpu_custom_call.1} parent=1 // pred_check_branch
      %40 = sbr.rel (0) target = $region45
    $region44: #{tpu_custom_call.1} parent=1 // pred_region
      _
    $region45: #{tpu_custom_call.1} parent=1 // pred_fallthru
      _
    %v42 = vld [vmem:[%s0] sm:$0xff]
    %v43 = vld [vmem:[%s0 + $0x8] sm:$0xff]
    %v44 = vld [vmem:[%s0 + $0x10] sm:$0xff]
    %v45 = vld [vmem:[%s0 + $0x18] sm:$0xff]
    %v46 = vld [vmem:[%s0 + $0x20] sm:$0xff]
    %v47 = vld [vmem:[%s0 + $0x28] sm:$0xff]
    %v48 = vld [vmem:[%s0 + $0x30] sm:$0xff]
    %v49 = vld [vmem:[%s0 + $0x38] sm:$0xff]
    %v50 = vld [vmem:[%s0 + $0x40] sm:$0xff]
    %v51 = vld [vmem:[%s0 + $0x48] sm:$0xff]
    %v52 = vld [vmem:[%s0 + $0x50] sm:$0xff]
    %v53 = vld [vmem:[%s0 + $0x58] sm:$0xff]
    %v54 = vld [vmem:[%s0 + $0x60] sm:$0xff]
    %v55 = vld [vmem:[%s0 + $0x68] sm:$0xff]
    %v56 = vld [vmem:[%s0 + $0x70] sm:$0xff]
    %v57 = vld [vmem:[%s0 + $0x78] sm:$0xff]
    %v58 = vpack.c.bf16 %v43, %v42
    %v59 = vpack.c.bf16 %v45, %v44
    %v60 = vpack.c.bf16 %v47, %v46
    %v61 = vpack.c.bf16 %v49, %v48
    %v62 = vpack.c.bf16 %v51, %v50
    %v63 = vpack.c.bf16 %v53, %v52
    %v64 = vpack.c.bf16 %v55, %v54
    %v65 = vpack.c.bf16 %v57, %v56
    %v66 = vld [vmem:[%s1] sm:$0xf]
    %v67 = vld [vmem:[%s1 + $0x4] sm:$0xf]
    %v68 = vld [vmem:[%s1 + $0x8] sm:$0xf]
    %v69 = vld [vmem:[%s1 + $0xc] sm:$0xf]
    %v70 = vld [vmem:[%s2] sm:$0x1]
    %v72 = vlaneseq
    %v73 = vshrl.u32 %v72, 7
    %v74 = vsub.s32 0, %v73
    %v75 = vrot.slane %v70, %v74
    %v81 = vunpack.c.l.b16 %v66
    %v82 = vunpack.c.l.b16 %v67
    %v83 = vunpack.c.l.b16 %v68
    %v84 = vunpack.c.l.b16 %v69
    %v85 = vpack.c.b16 %v82, %v81
    %v86 = vpack.c.b16 %v84, %v83
    %vm89 = vcmask 261120
    %v91 = vsel %vm89, %v58, 0
    %v94 = vsel %vm89, %v59, 0
    %v97 = vsel %vm89, %v60, 0
    %v100 = vsel %vm89, %v61, 0
    %v103 = vsel %vm89, %v62, 0
    %v106 = vsel %vm89, %v63, 0
    %v109 = vsel %vm89, %v64, 0
    %v112 = vsel %vm89, %v65, 0
    %114 = vmatprep.subr.bf16.mxu0 0
    %115 = vmatpush1.bf16.msra.mxu0 0
    %116 = vmatprep.subr.bf16.mxu0 0
    %117 = vmatpush1.bf16.msra.mxu0 0
    %118 = vmatprep.subr.bf16.mxu0 0
    %119 = vmatpush1.bf16.msra.mxu0 0
    %120 = vmatprep.subr.bf16.mxu0 0
    %121 = vmatpush1.bf16.msra.mxu0 0
    %122 = vmatprep.subr.bf16.mxu0 0
    %123 = vmatpush1.bf16.msra.mxu0 0
    %124 = vmatprep.subr.bf16.mxu0 0
    %125 = vmatpush1.bf16.msra.mxu0 0
    %126 = vmatprep.subr.bf16.mxu0 0
    %127 = vmatpush1.bf16.msra.mxu0 %v86
    %128 = vmatprep.subr.bf16.mxu0 0
    %129 = vmatpush1.bf16.msra.mxu0 %v85
    %130 = vmatprep.subr.bf16.mxu0 0
    %131 = vmatpush2.bf16.msra.mxu0 0
    %132 = vmatprep.subr.bf16.mxu0 0
    %133 = vmatpush2.bf16.msra.mxu0 0
    %134 = vmatprep.subr.bf16.mxu0 0
    %135 = vmatpush2.bf16.msra.mxu0 0
    %136 = vmatprep.subr.bf16.mxu0 0
    %137 = vmatpush2.bf16.msra.mxu0 0
    %138 = vmatprep.subr.bf16.mxu0 0
    %139 = vmatpush2.bf16.msra.mxu0 0
    %140 = vmatprep.subr.bf16.mxu0 0
    %141 = vmatpush2.bf16.msra.mxu0 0
    %142 = vmatprep.subr.bf16.mxu0 0
    %143 = vmatpush2.bf16.msra.mxu0 0
    %144 = vmatprep.subr.bf16.mxu0 0
    %145 = vmatpush2.bf16.msra.mxu0 0
    %146 = vmatprep.mubr.bf16.mxu0 0
    %147 = vmatmul.mubr.bf16.gmra.mxu0 %v91
    %v148 = vpop.f32.mrf.mxu0
    %v149 = vadd.f32 %v75, %v148
    %v150 = vpop.f32.mrf.mxu0
    %v151 = vpop.f32.mrf.mxu0
    %v152 = vadd.f32 %v75, %v151
    %v153 = vpop.f32.mrf.mxu0
    %154 = vmatprep.mubr.bf16.mxu0 0
    %155 = vmatmul.mubr.bf16.gmra.mxu0 %v94
    %v156 = vpop.f32.mrf.mxu0
    %v157 = vadd.f32 %v75, %v156
    %v158 = vpop.f32.mrf.mxu0
    %v159 = vpop.f32.mrf.mxu0
    %v160 = vadd.f32 %v75, %v159
    %v161 = vpop.f32.mrf.mxu0
    %162 = vmatprep.mubr.bf16.mxu0 0
    %163 = vmatmul.mubr.bf16.gmra.mxu0 %v97
    %v164 = vpop.f32.mrf.mxu0
    %v165 = vadd.f32 %v75, %v164
    %v166 = vpop.f32.mrf.mxu0
    %v167 = vpop.f32.mrf.mxu0
    %v168 = vadd.f32 %v75, %v167
    %v169 = vpop.f32.mrf.mxu0
    %170 = vmatprep.mubr.bf16.mxu0 0
    %171 = vmatmul.mubr.bf16.gmra.mxu0 %v100
    %v172 = vpop.f32.mrf.mxu0
    %v173 = vadd.f32 %v75, %v172
    %v174 = vpop.f32.mrf.mxu0
    %v175 = vpop.f32.mrf.mxu0
    %v176 = vadd.f32 %v75, %v175
    %v177 = vpop.f32.mrf.mxu0
    %178 = vmatprep.mubr.bf16.mxu0 0
    %179 = vmatmul.mubr.bf16.gmra.mxu0 %v103
    %v180 = vpop.f32.mrf.mxu0
    %v181 = vadd.f32 %v75, %v180
    %v182 = vpop.f32.mrf.mxu0
    %v183 = vpop.f32.mrf.mxu0
    %v184 = vadd.f32 %v75, %v183
    %v185 = vpop.f32.mrf.mxu0
    %186 = vmatprep.mubr.bf16.mxu0 0
    %187 = vmatmul.mubr.bf16.gmra.mxu0 %v106
    %v188 = vpop.f32.mrf.mxu0
    %v189 = vadd.f32 %v75, %v188
    %v190 = vpop.f32.mrf.mxu0
    %v191 = vpop.f32.mrf.mxu0
    %v192 = vadd.f32 %v75, %v191
    %v193 = vpop.f32.mrf.mxu0
    %194 = vmatprep.mubr.bf16.mxu0 0
    %195 = vmatmul.mubr.bf16.gmra.mxu0 %v109
    %v196 = vpop.f32.mrf.mxu0
    %v197 = vadd.f32 %v75, %v196
    %v198 = vpop.f32.mrf.mxu0
    %v199 = vpop.f32.mrf.mxu0
    %v200 = vadd.f32 %v75, %v199
    %v201 = vpop.f32.mrf.mxu0
    %202 = vmatprep.mubr.bf16.mxu0 0
    %203 = vmatmul.mubr.bf16.gmra.mxu0 %v112
    %v204 = vpop.f32.mrf.mxu0
    %v205 = vadd.f32 %v75, %v204
    %v206 = vpop.f32.mrf.mxu0
    %v207 = vpop.f32.mrf.mxu0
    %v208 = vadd.f32 %v75, %v207
    %v209 = vpop.f32.mrf.mxu0
    %210 = vdwg.mxu0
    %v211 = vmax.f32 %v149, 0.0
    %v212 = vmax.f32 %v152, 0.0
    %v213 = vmax.f32 %v157, 0.0
    %v214 = vmax.f32 %v160, 0.0
    %v215 = vmax.f32 %v165, 0.0
    %v216 = vmax.f32 %v168, 0.0
    %v217 = vmax.f32 %v173, 0.0
    %v218 = vmax.f32 %v176, 0.0
    %v219 = vmax.f32 %v181, 0.0
    %v220 = vmax.f32 %v184, 0.0
    %v221 = vmax.f32 %v189, 0.0
    %v222 = vmax.f32 %v192, 0.0
    %v223 = vmax.f32 %v197, 0.0
    %v224 = vmax.f32 %v200, 0.0
    %v225 = vmax.f32 %v205, 0.0
    %v226 = vmax.f32 %v208, 0.0
    %227 = vxpose.xlu0.b32.start [1/16] %v211, 128
    %228 = vxpose.xlu0.b32.cont [2/16] %v212, 128
    %229 = vxpose.xlu0.b32.cont [3/16] %v213, 128
    %230 = vxpose.xlu0.b32.cont [4/16] %v214, 128
    %231 = vxpose.xlu0.b32.cont [5/16] %v215, 128
    %232 = vxpose.xlu0.b32.cont [6/16] %v216, 128
    %233 = vxpose.xlu0.b32.cont [7/16] %v217, 128
    %234 = vxpose.xlu0.b32.cont [8/16] %v218, 128
    %235 = vxpose.xlu0.b32.cont [9/16] %v219, 128
    %236 = vxpose.xlu0.b32.cont [10/16] %v220, 128
    %237 = vxpose.xlu0.b32.cont [11/16] %v221, 128
    %238 = vxpose.xlu0.b32.cont [12/16] %v222, 128
    %239 = vxpose.xlu0.b32.cont [13/16] %v223, 128
    %240 = vxpose.xlu0.b32.cont [14/16] %v224, 128
    %241 = vxpose.xlu0.b32.cont [15/16] %v225, 128
    %242 = vxpose.xlu0.b32.end [16/16] %v226, 128
    %v243 = vpop.trf.xlu0
    %v244 = vpop.trf.xlu0
    %v245 = vpop.trf.xlu0
    %v246 = vpop.trf.xlu0
    %v247 = vpop.trf.xlu0
    %v248 = vpop.trf.xlu0
    %v249 = vpop.trf.xlu0
    %v250 = vpop.trf.xlu0
    %v251 = vpop.trf.xlu0
    %v252 = vpop.trf.xlu0
    %v253 = vpop.trf.xlu0
    %v254 = vpop.trf.xlu0
    %v255 = vpop.trf.xlu0
    %v256 = vpop.trf.xlu0
    %v257 = vpop.trf.xlu0
    %v258 = vpop.trf.xlu0
    %v259 = vld [vmem:[%s3] sm:$0xf]
    %v260 = vld [vmem:[%s3 + $0x4] sm:$0xf]
    %v261 = vpack.c.bf16 %v244, %v243
    %v262 = vld [vmem:[%s4] sm:$0xff]
    %v263 = vld [vmem:[%s4 + $0x8] sm:$0xff]
    %265 = vset.pattern.permute.xlu0 0
    %266 = vperm.xlu0 %265, %v262
    %v267 = vpop.permute.xlu0 %266
    %270 = vset.pattern.permute.xlu0 0
    %271 = vperm.xlu0 %270, %v263
    %v272 = vpop.permute.xlu0 %271
    %v276 = vunpack.c.l.b16 %v259
    %v277 = vunpack.c.l.b16 %v260
    %v278 = vpack.c.b16 %v277, %v276
    %vm279 = vcmask 130048
    %v281 = vsel %vm279, %v278, 0
    %283 = vmatprep.subr.bf16.mxu0 0
    %284 = vmatpush1.bf16.msra.mxu0 0
    %285 = vmatprep.subr.bf16.mxu0 0
    %286 = vmatpush1.bf16.msra.mxu0 0
    %287 = vmatprep.subr.bf16.mxu0 0
    %288 = vmatpush1.bf16.msra.mxu0 0
    %289 = vmatprep.subr.bf16.mxu0 0
    %290 = vmatpush1.bf16.msra.mxu0 0
    %291 = vmatprep.subr.bf16.mxu0 0
    %292 = vmatpush1.bf16.msra.mxu0 0
    %293 = vmatprep.subr.bf16.mxu0 0
    %294 = vmatpush1.bf16.msra.mxu0 0
    %295 = vmatprep.subr.bf16.mxu0 0
    %296 = vmatpush1.bf16.msra.mxu0 0
    %297 = vmatprep.subr.bf16.mxu0 0
    %298 = vmatpush1.bf16.msra.mxu0 %v261
    %299 = vmatprep.subr.bf16.mxu0 0
    %300 = vmatpush2.bf16.msra.mxu0 0
    %301 = vmatprep.subr.bf16.mxu0 0
    %302 = vmatpush2.bf16.msra.mxu0 0
    %303 = vmatprep.subr.bf16.mxu0 0
    %304 = vmatpush2.bf16.msra.mxu0 0
    %305 = vmatprep.subr.bf16.mxu0 0
    %306 = vmatpush2.bf16.msra.mxu0 0
    %307 = vmatprep.subr.bf16.mxu0 0
    %308 = vmatpush2.bf16.msra.mxu0 0
    %309 = vmatprep.subr.bf16.mxu0 0
    %310 = vmatpush2.bf16.msra.mxu0 0
    %311 = vmatprep.subr.bf16.mxu0 0
    %312 = vmatpush2.bf16.msra.mxu0 0
    %313 = vmatprep.subr.bf16.mxu0 0
    %314 = vmatpush2.bf16.msra.mxu0 0
    %315 = vmatprep.mubr.bf16.mxu0 0
    %316 = vmatmul.mubr.bf16.gmra.mxu0 %v281
    %v317 = vpop.f32.mrf.mxu0
    %v318 = vadd.f32 %v267, %v317
    %v319 = vpop.f32.mrf.mxu0
    %v320 = vpop.f32.mrf.mxu0
    %v321 = vadd.f32 %v272, %v320
    %v322 = vpop.f32.mrf.mxu0
    %323 = vdwg.mxu0
    %v324 = vmax.f32 %v318, 0.0
    %v325 = vmax.f32 %v321, 0.0
    %v326 = vld [vmem:[%s5] sm:$0xf]
    %v327 = vld [vmem:[%s5 + $0x4] sm:$0xf]
    %v328 = vpack.c.bf16 %v325, %v324
    %v329 = vld [vmem:[%s6] sm:$0xff]
    %v330 = vld [vmem:[%s6 + $0x8] sm:$0xff]
    %332 = vset.pattern.permute.xlu0 0
    %333 = vperm.xlu0 %332, %v329
    %v334 = vpop.permute.xlu0 %333
    %337 = vset.pattern.permute.xlu0 0
    %338 = vperm.xlu0 %337, %v330
    %v339 = vpop.permute.xlu0 %338
    %v343 = vunpack.c.l.b16 %v326
    %v344 = vunpack.c.l.b16 %v327
    %v345 = vpack.c.b16 %v344, %v343
    %v347 = vsel %vm279, %v345, 0
    %349 = vmatprep.subr.bf16.mxu0 0
    %350 = vmatpush1.bf16.msra.mxu0 0
    %351 = vmatprep.subr.bf16.mxu0 0
    %352 = vmatpush1.bf16.msra.mxu0 0
    %353 = vmatprep.subr.bf16.mxu0 0
    %354 = vmatpush1.bf16.msra.mxu0 0
    %355 = vmatprep.subr.bf16.mxu0 0
    %356 = vmatpush1.bf16.msra.mxu0 0
    %357 = vmatprep.subr.bf16.mxu0 0
    %358 = vmatpush1.bf16.msra.mxu0 0
    %359 = vmatprep.subr.bf16.mxu0 0
    %360 = vmatpush1.bf16.msra.mxu0 0
    %361 = vmatprep.subr.bf16.mxu0 0
    %362 = vmatpush1.bf16.msra.mxu0 0
    %363 = vmatprep.subr.bf16.mxu0 0
    %364 = vmatpush1.bf16.msra.mxu0 %v328
    %365 = vmatprep.subr.bf16.mxu0 0
    %366 = vmatpush2.bf16.msra.mxu0 0
    %367 = vmatprep.subr.bf16.mxu0 0
    %368 = vmatpush2.bf16.msra.mxu0 0
    %369 = vmatprep.subr.bf16.mxu0 0
    %370 = vmatpush2.bf16.msra.mxu0 0
    %371 = vmatprep.subr.bf16.mxu0 0
    %372 = vmatpush2.bf16.msra.mxu0 0
    %373 = vmatprep.subr.bf16.mxu0 0
    %374 = vmatpush2.bf16.msra.mxu0 0
    %375 = vmatprep.subr.bf16.mxu0 0
    %376 = vmatpush2.bf16.msra.mxu0 0
    %377 = vmatprep.subr.bf16.mxu0 0
    %378 = vmatpush2.bf16.msra.mxu0 0
    %379 = vmatprep.subr.bf16.mxu0 0
    %380 = vmatpush2.bf16.msra.mxu0 0
    %381 = vmatprep.mubr.bf16.mxu0 0
    %382 = vmatmul.mubr.bf16.gmra.mxu0 %v347
    %v383 = vpop.f32.mrf.mxu0
    %v384 = vadd.f32 %v334, %v383
    %v385 = vpop.f32.mrf.mxu0
    %v386 = vpop.f32.mrf.mxu0
    %v387 = vadd.f32 %v339, %v386
    %v388 = vpop.f32.mrf.mxu0
    %389 = vdwg.mxu0
    %v390 = vmax.f32 %v384, 0.0
    %v391 = vmax.f32 %v387, 0.0
    %v392 = vld [vmem:[%s7] sm:$0xf]
    %v393 = vpack.c.bf16 %v391, %v390
    %v394 = vld [vmem:[%s8] sm:$0xff]
    %396 = vset.pattern.permute.xlu0 0
    %397 = vperm.xlu0 %396, %v394
    %v398 = vpop.permute.xlu0 %397
    %v401 = vsel %vm279, %v392, 0
    %403 = vmatprep.subr.bf16.mxu0 0
    %404 = vmatpush1.bf16.msra.mxu0 0
    %405 = vmatprep.subr.bf16.mxu0 0
    %406 = vmatpush1.bf16.msra.mxu0 0
    %407 = vmatprep.subr.bf16.mxu0 0
    %408 = vmatpush1.bf16.msra.mxu0 0
    %409 = vmatprep.subr.bf16.mxu0 0
    %410 = vmatpush1.bf16.msra.mxu0 0
    %411 = vmatprep.subr.bf16.mxu0 0
    %412 = vmatpush1.bf16.msra.mxu0 0
    %413 = vmatprep.subr.bf16.mxu0 0
    %414 = vmatpush1.bf16.msra.mxu0 0
    %415 = vmatprep.subr.bf16.mxu0 0
    %416 = vmatpush1.bf16.msra.mxu0 0
    %417 = vmatprep.subr.bf16.mxu0 0
    %418 = vmatpush1.bf16.msra.mxu0 %v393
    %419 = vmatprep.subr.bf16.mxu0 0
    %420 = vmatpush2.bf16.msra.mxu0 0
    %421 = vmatprep.subr.bf16.mxu0 0
    %422 = vmatpush2.bf16.msra.mxu0 0
    %423 = vmatprep.subr.bf16.mxu0 0
    %424 = vmatpush2.bf16.msra.mxu0 0
    %425 = vmatprep.subr.bf16.mxu0 0
    %426 = vmatpush2.bf16.msra.mxu0 0
    %427 = vmatprep.subr.bf16.mxu0 0
    %428 = vmatpush2.bf16.msra.mxu0 0
    %429 = vmatprep.subr.bf16.mxu0 0
    %430 = vmatpush2.bf16.msra.mxu0 0
    %431 = vmatprep.subr.bf16.mxu0 0
    %432 = vmatpush2.bf16.msra.mxu0 0
    %433 = vmatprep.subr.bf16.mxu0 0
    %434 = vmatpush2.bf16.msra.mxu0 0
    %435 = vmatprep.mubr.bf16.mxu0 0
    %436 = vmatmul.mubr.bf16.gmra.mxu0 %v401
    %v437 = vpop.f32.mrf.mxu0
    %v438 = vadd.f32 %v398, %v437
    %v439 = vpop.f32.mrf.mxu0
    %v440 = vpop.f32.mrf.mxu0
    %v441 = vpop.f32.mrf.mxu0
    %442 = vdwg.mxu0
    %v443 = vmax.f32 %v438, 0.0
    %v444 = vld [vmem:[%s9] sm:$0x1]
    %v445 = vpack.c.bf16 %v443, %v443
    %v446 = vld [vmem:[#allocation2] sm:$0x1]
    %448 = vset.pattern.permute.xlu0 0
    %449 = vperm.xlu0 %448, %v446
    %v450 = vpop.permute.xlu0 %449
    %v452 = vlaneseq
    %v453 = vshrl.u32 %v452, 7
    %v454 = vsub.s32 0, %v453
    %v455 = vrot.slane %v450, %v454
    %vm456 = vcmask 64512
    %v458 = vsel %vm456, %v444, 0
    %vm460 = vcmask 1043456
    %v462 = vsel %vm460, %v445, 0
    %464 = vmatprep.subr.bf16.mxu0 0
    %465 = vmatpush1.bf16.msra.mxu0 0
    %466 = vmatprep.subr.bf16.mxu0 0
    %467 = vmatpush1.bf16.msra.mxu0 0
    %468 = vmatprep.subr.bf16.mxu0 0
    %469 = vmatpush1.bf16.msra.mxu0 0
    %470 = vmatprep.subr.bf16.mxu0 0
    %471 = vmatpush1.bf16.msra.mxu0 0
    %472 = vmatprep.subr.bf16.mxu0 0
    %473 = vmatpush1.bf16.msra.mxu0 0
    %474 = vmatprep.subr.bf16.mxu0 0
    %475 = vmatpush1.bf16.msra.mxu0 0
    %476 = vmatprep.subr.bf16.mxu0 0
    %477 = vmatpush1.bf16.msra.mxu0 0
    %478 = vmatprep.subr.bf16.mxu0 0
    %479 = vmatpush1.bf16.msra.mxu0 %v462
    %480 = vmatprep.subr.bf16.mxu0 0
    %481 = vmatpush2.bf16.msra.mxu0 0
    %482 = vmatprep.subr.bf16.mxu0 0
    %483 = vmatpush2.bf16.msra.mxu0 0
    %484 = vmatprep.subr.bf16.mxu0 0
    %485 = vmatpush2.bf16.msra.mxu0 0
    %486 = vmatprep.subr.bf16.mxu0 0
    %487 = vmatpush2.bf16.msra.mxu0 0
    %488 = vmatprep.subr.bf16.mxu0 0
    %489 = vmatpush2.bf16.msra.mxu0 0
    %490 = vmatprep.subr.bf16.mxu0 0
    %491 = vmatpush2.bf16.msra.mxu0 0
    %492 = vmatprep.subr.bf16.mxu0 0
    %493 = vmatpush2.bf16.msra.mxu0 0
    %494 = vmatprep.subr.bf16.mxu0 0
    %495 = vmatpush2.bf16.msra.mxu0 0
    %496 = vmatprep.mubr.bf16.mxu0 0
    %497 = vmatmul.mubr.bf16.gmra.mxu0 %v458
    %v498 = vpop.f32.mrf.mxu0
    %v499 = vadd.f32 %v455, %v498
    %v500 = vpop.f32.mrf.mxu0
    %v501 = vpop.f32.mrf.mxu0
    %v502 = vpop.f32.mrf.mxu0
    %503 = vdwg.mxu0
    %504 = vst [vmem:[#allocation3] sm:$0x1] %v499
    // Predicated region
    $region46: #{tpu_custom_call.1} parent=1 // pred_check
      _
    $region47: #{tpu_custom_call.1} parent=1 // pred_check_branch
      %506 = sbr.rel (0) target = $region49
    $region48: #{tpu_custom_call.1} parent=1 // pred_region
      %s508 = ssub.s32 16, 16
      %509 = vsyncadd [#allocation4], %s508
      %s511 = sshll.u32 [#allocation3], 4
      %s512 = int_to_ptr.vmem [resolvable:$true] %s511
      %514 = dma.vmem_to_hbm [thread:$0]  %s512, 16, %s11, [#allocation4]
    $region49: #{tpu_custom_call.1} parent=1 // pred_fallthru
      _
    // Predicated region
    $region50: #{tpu_custom_call.1} parent=1 // pred_check
      _
    $region51: #{tpu_custom_call.1} parent=1 // pred_check_branch
      %516 = sbr.rel (0) target = $region53
    $region52: #{tpu_custom_call.1} parent=1 // pred_region
      %517 = dma.done [#allocation4], 16
    $region53: #{tpu_custom_call.1} parent=1 // pred_fallthru
      _
    %518 = vsyncpa [#allocation4], 1

</llo_original>
